<compile_context>
chip_gen: v5e
topology: v5e:2x2
jax: 0.10.0
libtpu: 0.0.40
codegen_flags: <defaults>
</compile_context>

<pallas_src>
import numpy as np
import jax
import jax.numpy as jnp
from jax import lax
from jax.experimental import pallas as pl
from jax.experimental.pallas import tpu as pltpu


def _round_up(x, m):
    return ((x + m - 1) // m) * m


def _border_masks(H, W, d):
    """(9, H*W) f32: mask[t, h*W+w] = 1 iff tap t's source pixel is inside the image."""
    hh = np.arange(H)[:, None]
    ww = np.arange(W)[None, :]
    rows = []
    for ky in range(3):
        for kx in range(3):
            dy, dx = (ky - 1) * d, (kx - 1) * d
            valid = ((hh + dy >= 0) & (hh + dy < H) &
                     (ww + dx >= 0) & (ww + dx < W))
            rows.append(valid.reshape(-1))
    return np.stack(rows).astype(np.float32)


def _choose_images_per_step(N, HW, target_lanes=2048, min_grid_steps=2):
    """How many images share one grid step (flattened into the lane axis).

    Bigger lane blocks amortize the ~0.35 us per-grid-step cost, but we keep at
    least `min_grid_steps` grid steps so both v7x TensorCores get work
    (no-op on single-TC v5e/v6e)."""
    nb = 1
    for cand in range(1, N + 1):
        if N % cand:
            continue
        if cand * HW > target_lanes:
            break
        if N >= min_grid_steps and N // cand < min_grid_steps:
            break
        nb = cand
    return nb


def _make_rfb_kernel(H, W, NB, Cin_p, Cout_p, Cout, d1, d2, matmul_dtype):
    HW = H * W
    L = NB * HW

    def tap_shifts(d):
        # roll amount so that rolled[:, p] == x[:, p + dy*W + dx]  (mod L)
        return [(-((ky - 1) * d * W + (kx - 1) * d)) % L
                for ky in range(3) for kx in range(3)]

    sh1, sh2 = tap_shifts(d1), tap_shifts(d2)

    def kernel(x_ref, w1_ref, m1_ref, w2_ref, m2_ref, o_ref):
        # Bias-fold block: row 0 = ones, rows 1..7 = zeros (8 rows keeps the stack
        # sublane-aligned).  Generated in-kernel; used by both stages.
        row_id = lax.broadcasted_iota(jnp.int32, (8, L), 0)
        ones_blk = (row_id == 0).astype(jnp.float32)

        def stacked_taps(src, shifts, m_ref):
            # src: (C_p, L) f32 -> (9*C_p + 8, L) matmul_dtype.
            # Rolls run on the XLU, mask multiplies on the VPU (kept in f32 for
            # v5e which has no bf16 VPU); one cast packs the whole stack for the MXU.
            # NOTE: with small C the binding slot is likely XLU (8 rolls/stage) or
            # VPU, not MXU — build the stack once and reuse it, no extra rolls.
            blocks = []
            for t, s in enumerate(shifts):
                if s == 0:                         # centre tap: no shift, never clipped
                    blocks.append(src)
                else:                              # XLU lane rotation + zero-pad mask
                    blocks.append(pltpu.roll(src, shift=s, axis=1) * m_ref[t])
            blocks.append(ones_blk)                # folds the bias into the matmul
            return jnp.concatenate(blocks, axis=0).astype(matmul_dtype)

        x = x_ref[0].astype(jnp.float32)                              # (Cin_p, L)

        # Stage 1: depthwise 3x3 + BN + 1x1 folded into ONE matmul (K = 9*Cin_p + 8)
        y = jnp.dot(w1_ref[...], stacked_taps(x, sh1, m1_ref),
                    preferred_element_type=jnp.float32)               # (Cout_p, L) f32

        # Stage 2: depthwise 3x3 dil=3 + BN + 1x1 folded into ONE matmul
        z = jnp.dot(w2_ref[...], stacked_taps(y, sh2, m2_ref),
                    preferred_element_type=jnp.float32)               # (Cout, L) f32

        o_ref[0] = z.astype(o_ref.dtype)                              # lane-dense store

    return kernel


def depthwise_rfb_forward(x_nchw, params, *, matmul_dtype=jnp.bfloat16,
                          images_per_step=None):
    # bf16 operands hit the native MXU path on v5e/v6e/v7x (f32 is decomposed);
    # accumulation stays f32.  Pass matmul_dtype=jnp.float32 for exact numerics.
    N, Cin, H, W = x_nchw.shape
    Cout = params["w1"].shape[1]
    HW = H * W
    d1, d2 = 1, 3                 # conv0 dilation, conv2 dilation (= receptive_size)

    Cin_p = _round_up(Cin, 8)     # pad channels to a sublane multiple
    Cout_p = _round_up(Cout, 8)
    K1, K2 = 9 * Cin_p, 9 * Cout_p

    NB = images_per_step if images_per_step is not None else _choose_images_per_step(N, HW)
    assert N % NB == 0, "images_per_step must divide the batch"
    G = N // NB
    L = NB * HW                   # lanes per grid step

    # ---- fold (depthwise + BN + 1x1) into stacked dense matrices (host side) ----
    # W1s[o, t*Cin_p + c] = w0[ky,kx,c]*bn0_scale[c]*w1[c,o]; column K1 carries the bias.
    w1f = jnp.einsum("yxc,c,co->oyxc", params["w0"], params["bn0_scale"], params["w1"])
    w1f = jnp.pad(w1f, ((0, Cout_p - Cout), (0, 0), (0, 0), (0, Cin_p - Cin)))
    w1f = w1f.reshape(Cout_p, K1)
    b1 = jnp.pad(params["bn0_shift"] @ params["w1"], (0, Cout_p - Cout))
    w1s = jnp.concatenate(
        [w1f, b1[:, None], jnp.zeros((Cout_p, 7), jnp.float32)], axis=1
    ).astype(matmul_dtype)                                            # (Cout_p, K1+8)

    w2f = jnp.einsum("yxc,c,co->oyxc", params["w2"], params["bn2_scale"], params["w3"])
    w2f = jnp.pad(w2f, ((0, 0), (0, 0), (0, 0), (0, Cout_p - Cout)))
    w2f = w2f.reshape(Cout, K2)
    b2 = params["bn2_shift"] @ params["w3"]
    w2s = jnp.concatenate(
        [w2f, b2[:, None], jnp.zeros((Cout, 7), jnp.float32)], axis=1
    ).astype(matmul_dtype)                                            # (Cout, K2+8)

    # Per-image border masks, tiled NB times along the lane axis: the tiling also
    # zeroes the roll wrap-around between adjacent images in the concatenation.
    m1 = jnp.asarray(np.tile(_border_masks(H, W, d1), (1, NB)).reshape(9, 1, L))
    m2 = jnp.asarray(np.tile(_border_masks(H, W, d2), (1, NB)).reshape(9, 1, L))

    # NCHW -> (G, Cin_p, NB*HW): channels on sublanes (zero-padded to 8), NB images
    # flattened contiguously on the lane axis.
    x_flat = x_nchw.reshape(G, NB, Cin, HW)
    x_flat = jnp.pad(x_flat, ((0, 0), (0, 0), (0, Cin_p - Cin), (0, 0)))
    x_flat = jnp.transpose(x_flat, (0, 2, 1, 3)).reshape(G, Cin_p, L)

    kernel = _make_rfb_kernel(H, W, NB, Cin_p, Cout_p, Cout, d1, d2, matmul_dtype)

    out_flat = pl.pallas_call(
        kernel,
        out_shape=jax.ShapeDtypeStruct((G, Cout, L), x_nchw.dtype),
        grid=(G,),
        in_specs=[
            pl.BlockSpec((1, Cin_p, L), lambda g: (g, 0, 0)),       # x, NB images/step
            pl.BlockSpec((Cout_p, K1 + 8), lambda g: (0, 0)),       # stacked stage-1 W (+bias col)
            pl.BlockSpec((9, 1, L), lambda g: (0, 0, 0)),           # stage-1 border masks
            pl.BlockSpec((Cout, K2 + 8), lambda g: (0, 0)),         # stacked stage-2 W (+bias col)
            pl.BlockSpec((9, 1, L), lambda g: (0, 0, 0)),           # stage-2 border masks
        ],
        out_specs=pl.BlockSpec((1, Cout, L), lambda g: (g, 0, 0)),
        compiler_params=pltpu.CompilerParams(
            dimension_semantics=("parallel",),      # >=2 grid steps kept for v7x dual-TC
            vmem_limit_bytes=32 * 1024 * 1024,
        ),
    )(x_flat, w1s, m1, w2s, m2)

    out = out_flat.reshape(G, Cout, NB, HW).transpose(0, 2, 1, 3)
    return out.reshape(N, Cout, H, W)


def init_params(key, in_channel, out_channel):
    ks = jax.random.split(key, 12)
    eps = 1e-5  # BatchNorm2d default

    w0 = jax.random.normal(ks[0], (3, 3, in_channel), jnp.float32) * 0.2
    w1 = jax.random.normal(ks[1], (in_channel, out_channel), jnp.float32) * 0.2
    w2 = jax.random.normal(ks[2], (3, 3, out_channel), jnp.float32) * 0.2
    w3 = jax.random.normal(ks[3], (out_channel, out_channel), jnp.float32) * 0.2

    # BatchNorm params (inference mode: fold into per-channel scale/shift)
    g0 = 1.0 + 0.1 * jax.random.normal(ks[4], (in_channel,), jnp.float32)
    b0 = 0.1 * jax.random.normal(ks[5], (in_channel,), jnp.float32)
    m0 = 0.1 * jax.random.normal(ks[6], (in_channel,), jnp.float32)
    v0 = jax.random.uniform(ks[7], (in_channel,), jnp.float32, 0.5, 1.5)
    g2 = 1.0 + 0.1 * jax.random.normal(ks[8], (out_channel,), jnp.float32)
    b2 = 0.1 * jax.random.normal(ks[9], (out_channel,), jnp.float32)
    m2 = 0.1 * jax.random.normal(ks[10], (out_channel,), jnp.float32)
    v2 = jax.random.uniform(ks[11], (out_channel,), jnp.float32, 0.5, 1.5)

    s0 = g0 / jnp.sqrt(v0 + eps)
    s2 = g2 / jnp.sqrt(v2 + eps)
    return {
        "w0": w0, "w1": w1, "w2": w2, "w3": w3,
        "bn0_scale": s0, "bn0_shift": b0 - m0 * s0,
        "bn2_scale": s2, "bn2_shift": b2 - m2 * s2,
    }


def reference_forward(x_nchw, params):
    """Pure-JAX/XLA reference matching the PyTorch module (eval mode)."""
    Cin = x_nchw.shape[1]
    dn = ("NCHW", "OIHW", "NCHW")

    w0 = jnp.transpose(params["w0"], (2, 0, 1))[:, None, :, :]        # (Cin,1,3,3)
    y = lax.conv_general_dilated(x_nchw, w0, (1, 1), "SAME",
                                 feature_group_count=Cin, dimension_numbers=dn)
    y = y * params["bn0_scale"][None, :, None, None] + params["bn0_shift"][None, :, None, None]

    w1 = jnp.transpose(params["w1"])[:, :, None, None]                # (Cout,Cin,1,1)
    y = lax.conv_general_dilated(y, w1, (1, 1), "SAME", dimension_numbers=dn)

    Cout = y.shape[1]
    w2 = jnp.transpose(params["w2"], (2, 0, 1))[:, None, :, :]        # (Cout,1,3,3)
    y = lax.conv_general_dilated(y, w2, (1, 1), "SAME", rhs_dilation=(3, 3),
                                 feature_group_count=Cout, dimension_numbers=dn)
    y = y * params["bn2_scale"][None, :, None, None] + params["bn2_shift"][None, :, None, None]

    w3 = jnp.transpose(params["w3"])[:, :, None, None]                # (Cout,Cout,1,1)
    y = lax.conv_general_dilated(y, w3, (1, 1), "SAME", dimension_numbers=dn)
    return y


if __name__ == "__main__":
    N, Cin, Cout, H, W = 2, 4, 8, 16, 16
    key = jax.random.PRNGKey(0)
    k_x, k_p = jax.random.split(key)
    x = jax.random.normal(k_x, (N, Cin, H, W), jnp.float32)
    params = init_params(k_p, Cin, Cout)

    ref = jax.block_until_ready(reference_forward(x, params))

    # Exact-numerics path (f32 MXU operands): tight tolerance.
    out_f32 = jax.block_until_ready(
        depthwise_rfb_forward(x, params, matmul_dtype=jnp.float32))
    assert out_f32.shape == (N, Cout, H, W)
    err_f32 = float(jnp.max(jnp.abs(out_f32 - ref)))
    assert jnp.allclose(out_f32, ref, atol=1e-3, rtol=1e-3), f"f32 max abs err {err_f32}"

    # Default fast path (bf16 MXU operands, f32 accumulation): looser tolerance.
    out_bf16 = jax.block_until_ready(depthwise_rfb_forward(x, params))
    err_bf16 = float(jnp.max(jnp.abs(out_bf16 - ref)))
    assert jnp.allclose(out_bf16, ref, atol=5e-2, rtol=5e-2), f"bf16 max abs err {err_bf16}"

    print("KERNEL_OK")
</pallas_src>

<mosaic_0001>
module attributes {stable_mosaic.version = 11 : i64} {
  func.func @kernel(%arg0: i32, %arg1: memref<1x8x256xf32, #tpu.memory_space<vmem>>, %arg2: memref<8x80xf32, #tpu.memory_space<vmem>>, %arg3: memref<9x1x256xf32, #tpu.memory_space<vmem>>, %arg4: memref<8x80xf32, #tpu.memory_space<vmem>>, %arg5: memref<9x1x256xf32, #tpu.memory_space<vmem>>, %arg6: memref<1x8x256xf32, #tpu.memory_space<vmem>>) attributes {dimension_semantics = [#tpu.dimension_semantics<parallel>], iteration_bounds = array<i64: 2>, scalar_prefetch = 0 : i64, scratch_operands = 0 : i64, tpu.core_type = #tpu.core_type<tc>, window_params = [{transform_indices = @transform_0, window_bounds = array<i64: 1, 8, 256>}, {pipeline_mode = #tpu.pipeline_mode<synchronous>, transform_indices = @transform_1, window_bounds = array<i64: 8, 80>}, {pipeline_mode = #tpu.pipeline_mode<synchronous>, transform_indices = @transform_2, window_bounds = array<i64: 9, 1, 256>}, {pipeline_mode = #tpu.pipeline_mode<synchronous>, transform_indices = @transform_3, window_bounds = array<i64: 8, 80>}, {pipeline_mode = #tpu.pipeline_mode<synchronous>, transform_indices = @transform_4, window_bounds = array<i64: 9, 1, 256>}, {transform_indices = @transform_5, window_bounds = array<i64: 1, 8, 256>}]} {
    %0 = tpu.iota {dimensions = array<i32: 0>} : vector<8x256xi32>
    %c0_i32 = arith.constant 0 : i32
    %1 = vector.broadcast %c0_i32 : i32 to vector<8x256xi32>
    %2 = arith.cmpi eq, %0, %1 : vector<8x256xi32>
    %3 = arith.extui %2 : vector<8x256xi1> to vector<8x256xi32>
    %4 = arith.sitofp %3 : vector<8x256xi32> to vector<8x256xf32>
    %c0 = arith.constant 0 : index
    %c0_0 = arith.constant 0 : index
    %c0_1 = arith.constant 0 : index
    %5 = vector.load %arg1[%c0, %c0_0, %c0_1] : memref<1x8x256xf32, #tpu.memory_space<vmem>>, vector<1x8x256xf32>
    %6 = vector.shape_cast %5 : vector<1x8x256xf32> to vector<8x256xf32>
    %c0_2 = arith.constant 0 : index
    %c0_3 = arith.constant 0 : index
    %7 = vector.load %arg2[%c0_2, %c0_3] : memref<8x80xf32, #tpu.memory_space<vmem>>, vector<8x80xf32>
    %c17_i32 = arith.constant 17 : i32
    %8 = tpu.dynamic_rotate %6 by %c17_i32 dim 1 : vector<8x256xf32>, i32 -> vector<8x256xf32>
    %c0_4 = arith.constant 0 : index
    %c0_5 = arith.constant 0 : index
    %c0_6 = arith.constant 0 : index
    %9 = vector.load %arg3[%c0_4, %c0_5, %c0_6] : memref<9x1x256xf32, #tpu.memory_space<vmem>>, vector<1x1x256xf32>
    %10 = vector.shape_cast %9 : vector<1x1x256xf32> to vector<1x256xf32>
    %11 = vector.broadcast %10 : vector<1x256xf32> to vector<8x256xf32>
    %12 = arith.mulf %8, %11 : vector<8x256xf32>
    %c16_i32 = arith.constant 16 : i32
    %13 = tpu.dynamic_rotate %6 by %c16_i32 dim 1 : vector<8x256xf32>, i32 -> vector<8x256xf32>
    %c1 = arith.constant 1 : index
    %c0_7 = arith.constant 0 : index
    %c0_8 = arith.constant 0 : index
    %14 = vector.load %arg3[%c1, %c0_7, %c0_8] : memref<9x1x256xf32, #tpu.memory_space<vmem>>, vector<1x1x256xf32>
    %15 = vector.shape_cast %14 : vector<1x1x256xf32> to vector<1x256xf32>
    %16 = vector.broadcast %15 : vector<1x256xf32> to vector<8x256xf32>
    %17 = arith.mulf %13, %16 : vector<8x256xf32>
    %c15_i32 = arith.constant 15 : i32
    %18 = tpu.dynamic_rotate %6 by %c15_i32 dim 1 : vector<8x256xf32>, i32 -> vector<8x256xf32>
    %c2 = arith.constant 2 : index
    %c0_9 = arith.constant 0 : index
    %c0_10 = arith.constant 0 : index
    %19 = vector.load %arg3[%c2, %c0_9, %c0_10] : memref<9x1x256xf32, #tpu.memory_space<vmem>>, vector<1x1x256xf32>
    %20 = vector.shape_cast %19 : vector<1x1x256xf32> to vector<1x256xf32>
    %21 = vector.broadcast %20 : vector<1x256xf32> to vector<8x256xf32>
    %22 = arith.mulf %18, %21 : vector<8x256xf32>
    %c1_i32 = arith.constant 1 : i32
    %23 = tpu.dynamic_rotate %6 by %c1_i32 dim 1 : vector<8x256xf32>, i32 -> vector<8x256xf32>
    %c3 = arith.constant 3 : index
    %c0_11 = arith.constant 0 : index
    %c0_12 = arith.constant 0 : index
    %24 = vector.load %arg3[%c3, %c0_11, %c0_12] : memref<9x1x256xf32, #tpu.memory_space<vmem>>, vector<1x1x256xf32>
    %25 = vector.shape_cast %24 : vector<1x1x256xf32> to vector<1x256xf32>
    %26 = vector.broadcast %25 : vector<1x256xf32> to vector<8x256xf32>
    %27 = arith.mulf %23, %26 : vector<8x256xf32>
    %c255_i32 = arith.constant 255 : i32
    %28 = tpu.dynamic_rotate %6 by %c255_i32 dim 1 : vector<8x256xf32>, i32 -> vector<8x256xf32>
    %c5 = arith.constant 5 : index
    %c0_13 = arith.constant 0 : index
    %c0_14 = arith.constant 0 : index
    %29 = vector.load %arg3[%c5, %c0_13, %c0_14] : memref<9x1x256xf32, #tpu.memory_space<vmem>>, vector<1x1x256xf32>
    %30 = vector.shape_cast %29 : vector<1x1x256xf32> to vector<1x256xf32>
    %31 = vector.broadcast %30 : vector<1x256xf32> to vector<8x256xf32>
    %32 = arith.mulf %28, %31 : vector<8x256xf32>
    %c241_i32 = arith.constant 241 : i32
    %33 = tpu.dynamic_rotate %6 by %c241_i32 dim 1 : vector<8x256xf32>, i32 -> vector<8x256xf32>
    %c6 = arith.constant 6 : index
    %c0_15 = arith.constant 0 : index
    %c0_16 = arith.constant 0 : index
    %34 = vector.load %arg3[%c6, %c0_15, %c0_16] : memref<9x1x256xf32, #tpu.memory_space<vmem>>, vector<1x1x256xf32>
    %35 = vector.shape_cast %34 : vector<1x1x256xf32> to vector<1x256xf32>
    %36 = vector.broadcast %35 : vector<1x256xf32> to vector<8x256xf32>
    %37 = arith.mulf %33, %36 : vector<8x256xf32>
    %c240_i32 = arith.constant 240 : i32
    %38 = tpu.dynamic_rotate %6 by %c240_i32 dim 1 : vector<8x256xf32>, i32 -> vector<8x256xf32>
    %c7 = arith.constant 7 : index
    %c0_17 = arith.constant 0 : index
    %c0_18 = arith.constant 0 : index
    %39 = vector.load %arg3[%c7, %c0_17, %c0_18] : memref<9x1x256xf32, #tpu.memory_space<vmem>>, vector<1x1x256xf32>
    %40 = vector.shape_cast %39 : vector<1x1x256xf32> to vector<1x256xf32>
    %41 = vector.broadcast %40 : vector<1x256xf32> to vector<8x256xf32>
    %42 = arith.mulf %38, %41 : vector<8x256xf32>
    %c239_i32 = arith.constant 239 : i32
    %43 = tpu.dynamic_rotate %6 by %c239_i32 dim 1 : vector<8x256xf32>, i32 -> vector<8x256xf32>
    %c8 = arith.constant 8 : index
    %c0_19 = arith.constant 0 : index
    %c0_20 = arith.constant 0 : index
    %44 = vector.load %arg3[%c8, %c0_19, %c0_20] : memref<9x1x256xf32, #tpu.memory_space<vmem>>, vector<1x1x256xf32>
    %45 = vector.shape_cast %44 : vector<1x1x256xf32> to vector<1x256xf32>
    %46 = vector.broadcast %45 : vector<1x256xf32> to vector<8x256xf32>
    %47 = arith.mulf %43, %46 : vector<8x256xf32>
    %48 = tpu.concatenate %12, %17, %22, %27, %6, %32, %37, %42, %47, %4 in 0 : vector<8x256xf32>, vector<8x256xf32>, vector<8x256xf32>, vector<8x256xf32>, vector<8x256xf32>, vector<8x256xf32>, vector<8x256xf32>, vector<8x256xf32>, vector<8x256xf32>, vector<8x256xf32> -> vector<80x256xf32>
    %cst = arith.constant dense<0.000000e+00> : vector<8x256xf32>
    %49 = tpu.matmul %7, %48, %cst {dimension_numbers = #tpu.dot_dimension_numbers<[1], [0], [0], [1], [0, 0, 1, 1], [], []>} : vector<8x80xf32>, vector<80x256xf32>, vector<8x256xf32> -> vector<8x256xf32>
    %c0_21 = arith.constant 0 : index
    %c0_22 = arith.constant 0 : index
    %50 = vector.load %arg4[%c0_21, %c0_22] : memref<8x80xf32, #tpu.memory_space<vmem>>, vector<8x80xf32>
    %c51_i32 = arith.constant 51 : i32
    %51 = tpu.dynamic_rotate %49 by %c51_i32 dim 1 : vector<8x256xf32>, i32 -> vector<8x256xf32>
    %c0_23 = arith.constant 0 : index
    %c0_24 = arith.constant 0 : index
    %c0_25 = arith.constant 0 : index
    %52 = vector.load %arg5[%c0_23, %c0_24, %c0_25] : memref<9x1x256xf32, #tpu.memory_space<vmem>>, vector<1x1x256xf32>
    %53 = vector.shape_cast %52 : vector<1x1x256xf32> to vector<1x256xf32>
    %54 = vector.broadcast %53 : vector<1x256xf32> to vector<8x256xf32>
    %55 = arith.mulf %51, %54 : vector<8x256xf32>
    %c48_i32 = arith.constant 48 : i32
    %56 = tpu.dynamic_rotate %49 by %c48_i32 dim 1 : vector<8x256xf32>, i32 -> vector<8x256xf32>
    %c1_26 = arith.constant 1 : index
    %c0_27 = arith.constant 0 : index
    %c0_28 = arith.constant 0 : index
    %57 = vector.load %arg5[%c1_26, %c0_27, %c0_28] : memref<9x1x256xf32, #tpu.memory_space<vmem>>, vector<1x1x256xf32>
    %58 = vector.shape_cast %57 : vector<1x1x256xf32> to vector<1x256xf32>
    %59 = vector.broadcast %58 : vector<1x256xf32> to vector<8x256xf32>
    %60 = arith.mulf %56, %59 : vector<8x256xf32>
    %c45_i32 = arith.constant 45 : i32
    %61 = tpu.dynamic_rotate %49 by %c45_i32 dim 1 : vector<8x256xf32>, i32 -> vector<8x256xf32>
    %c2_29 = arith.constant 2 : index
    %c0_30 = arith.constant 0 : index
    %c0_31 = arith.constant 0 : index
    %62 = vector.load %arg5[%c2_29, %c0_30, %c0_31] : memref<9x1x256xf32, #tpu.memory_space<vmem>>, vector<1x1x256xf32>
    %63 = vector.shape_cast %62 : vector<1x1x256xf32> to vector<1x256xf32>
    %64 = vector.broadcast %63 : vector<1x256xf32> to vector<8x256xf32>
    %65 = arith.mulf %61, %64 : vector<8x256xf32>
    %c3_i32 = arith.constant 3 : i32
    %66 = tpu.dynamic_rotate %49 by %c3_i32 dim 1 : vector<8x256xf32>, i32 -> vector<8x256xf32>
    %c3_32 = arith.constant 3 : index
    %c0_33 = arith.constant 0 : index
    %c0_34 = arith.constant 0 : index
    %67 = vector.load %arg5[%c3_32, %c0_33, %c0_34] : memref<9x1x256xf32, #tpu.memory_space<vmem>>, vector<1x1x256xf32>
    %68 = vector.shape_cast %67 : vector<1x1x256xf32> to vector<1x256xf32>
    %69 = vector.broadcast %68 : vector<1x256xf32> to vector<8x256xf32>
    %70 = arith.mulf %66, %69 : vector<8x256xf32>
    %c253_i32 = arith.constant 253 : i32
    %71 = tpu.dynamic_rotate %49 by %c253_i32 dim 1 : vector<8x256xf32>, i32 -> vector<8x256xf32>
    %c5_35 = arith.constant 5 : index
    %c0_36 = arith.constant 0 : index
    %c0_37 = arith.constant 0 : index
    %72 = vector.load %arg5[%c5_35, %c0_36, %c0_37] : memref<9x1x256xf32, #tpu.memory_space<vmem>>, vector<1x1x256xf32>
    %73 = vector.shape_cast %72 : vector<1x1x256xf32> to vector<1x256xf32>
    %74 = vector.broadcast %73 : vector<1x256xf32> to vector<8x256xf32>
    %75 = arith.mulf %71, %74 : vector<8x256xf32>
    %c211_i32 = arith.constant 211 : i32
    %76 = tpu.dynamic_rotate %49 by %c211_i32 dim 1 : vector<8x256xf32>, i32 -> vector<8x256xf32>
    %c6_38 = arith.constant 6 : index
    %c0_39 = arith.constant 0 : index
    %c0_40 = arith.constant 0 : index
    %77 = vector.load %arg5[%c6_38, %c0_39, %c0_40] : memref<9x1x256xf32, #tpu.memory_space<vmem>>, vector<1x1x256xf32>
    %78 = vector.shape_cast %77 : vector<1x1x256xf32> to vector<1x256xf32>
    %79 = vector.broadcast %78 : vector<1x256xf32> to vector<8x256xf32>
    %80 = arith.mulf %76, %79 : vector<8x256xf32>
    %c208_i32 = arith.constant 208 : i32
    %81 = tpu.dynamic_rotate %49 by %c208_i32 dim 1 : vector<8x256xf32>, i32 -> vector<8x256xf32>
    %c7_41 = arith.constant 7 : index
    %c0_42 = arith.constant 0 : index
    %c0_43 = arith.constant 0 : index
    %82 = vector.load %arg5[%c7_41, %c0_42, %c0_43] : memref<9x1x256xf32, #tpu.memory_space<vmem>>, vector<1x1x256xf32>
    %83 = vector.shape_cast %82 : vector<1x1x256xf32> to vector<1x256xf32>
    %84 = vector.broadcast %83 : vector<1x256xf32> to vector<8x256xf32>
    %85 = arith.mulf %81, %84 : vector<8x256xf32>
    %c205_i32 = arith.constant 205 : i32
    %86 = tpu.dynamic_rotate %49 by %c205_i32 dim 1 : vector<8x256xf32>, i32 -> vector<8x256xf32>
    %c8_44 = arith.constant 8 : index
    %c0_45 = arith.constant 0 : index
    %c0_46 = arith.constant 0 : index
    %87 = vector.load %arg5[%c8_44, %c0_45, %c0_46] : memref<9x1x256xf32, #tpu.memory_space<vmem>>, vector<1x1x256xf32>
    %88 = vector.shape_cast %87 : vector<1x1x256xf32> to vector<1x256xf32>
    %89 = vector.broadcast %88 : vector<1x256xf32> to vector<8x256xf32>
    %90 = arith.mulf %86, %89 : vector<8x256xf32>
    %91 = tpu.concatenate %55, %60, %65, %70, %49, %75, %80, %85, %90, %4 in 0 : vector<8x256xf32>, vector<8x256xf32>, vector<8x256xf32>, vector<8x256xf32>, vector<8x256xf32>, vector<8x256xf32>, vector<8x256xf32>, vector<8x256xf32>, vector<8x256xf32>, vector<8x256xf32> -> vector<80x256xf32>
    %cst_47 = arith.constant dense<0.000000e+00> : vector<8x256xf32>
    %92 = tpu.matmul %50, %91, %cst_47 {dimension_numbers = #tpu.dot_dimension_numbers<[1], [0], [0], [1], [0, 0, 1, 1], [], []>} : vector<8x80xf32>, vector<80x256xf32>, vector<8x256xf32> -> vector<8x256xf32>
    %c0_48 = arith.constant 0 : index
    %c0_49 = arith.constant 0 : index
    %c0_50 = arith.constant 0 : index
    %93 = vector.load %arg6[%c0_48, %c0_49, %c0_50] : memref<1x8x256xf32, #tpu.memory_space<vmem>>, vector<1x8x256xf32>
    %94 = vector.shape_cast %93 : vector<1x8x256xf32> to vector<8x256xf32>
    %95 = vector.shape_cast %92 : vector<8x256xf32> to vector<1x8x256xf32>
    tpu.vector_store %arg6[%c0_48, %c0_49, %c0_50], %95 {strides = array<i32>} : memref<1x8x256xf32, #tpu.memory_space<vmem>>, vector<1x8x256xf32>,
    return
  }
  func.func @transform_0(%arg0: i32) -> (i32, i32, i32) {
    %c0_i32 = arith.constant 0 : i32
    %c0_i32_0 = arith.constant 0 : i32
    %c0_i32_1 = arith.constant 0 : i32
    return %arg0, %c0_i32, %c0_i32_0 : i32, i32, i32
  }
  func.func @transform_1(%arg0: i32) -> (i32, i32) {
    %c0_i32 = arith.constant 0 : i32
    %c0_i32_0 = arith.constant 0 : i32
    %c0_i32_1 = arith.constant 0 : i32
    return %c0_i32, %c0_i32_0 : i32, i32
  }
  func.func @transform_2(%arg0: i32) -> (i32, i32, i32) {
    %c0_i32 = arith.constant 0 : i32
    %c0_i32_0 = arith.constant 0 : i32
    %c0_i32_1 = arith.constant 0 : i32
    %c0_i32_2 = arith.constant 0 : i32
    return %c0_i32, %c0_i32_0, %c0_i32_1 : i32, i32, i32
  }
  func.func @transform_3(%arg0: i32) -> (i32, i32) {
    %c0_i32 = arith.constant 0 : i32
    %c0_i32_0 = arith.constant 0 : i32
    %c0_i32_1 = arith.constant 0 : i32
    return %c0_i32, %c0_i32_0 : i32, i32
  }
  func.func @transform_4(%arg0: i32) -> (i32, i32, i32) {
    %c0_i32 = arith.constant 0 : i32
    %c0_i32_0 = arith.constant 0 : i32
    %c0_i32_1 = arith.constant 0 : i32
    %c0_i32_2 = arith.constant 0 : i32
    return %c0_i32, %c0_i32_0, %c0_i32_1 : i32, i32, i32
  }
  func.func @transform_5(%arg0: i32) -> (i32, i32, i32) {
    %c0_i32 = arith.constant 0 : i32
    %c0_i32_0 = arith.constant 0 : i32
    %c0_i32_1 = arith.constant 0 : i32
    return %arg0, %c0_i32, %c0_i32_0 : i32, i32, i32
  }
}

</mosaic_0001>

<llo_original>
// kernel: tpu_custom_call.1
$region0: #{tpu_custom_call.1}
  #allocation0 [shape = 'u32[]', space=smem, size = 0x4, offset = 0x4, fixed_abs, tag = 'smem constant byte address 0x4 - core index']
  #allocation1 [shape = 'u32[72,128]{1,0:T(1,128)}', space=vmem, size = 0x9000, scoped, tag = 'internal scratch']
  %s0 = inlined_call_operand.hbm [shape: f32[2,8,256], index: 0, kind: input, shape index: {}]
  %s1 = inlined_call_operand.hbm [shape: f32[8,80], index: 1, kind: input, shape index: {}]
  %s2 = inlined_call_operand.hbm [shape: f32[9,1,256], index: 2, kind: input, shape index: {}]
  %s3 = inlined_call_operand.hbm [shape: f32[8,80], index: 3, kind: input, shape index: {}]
  %s4 = inlined_call_operand.hbm [shape: f32[9,1,256], index: 4, kind: input, shape index: {}]
  %s5 = inlined_call_operand.hbm [shape: f32[2,8,256], index: 5, kind: output, shape index: {}]
  %s6 = sld [smem:[#allocation0]]
  $region73: #{tpu_custom_call.1} parent=0
    _
  %s8 = ssub.s32 1, %s6
  %s9 = scalar_select 0, %s8, %s6
  $region1: #{tpu_custom_call.1} parent=0
    #allocation2 [shape = 'u8[16384]{0}', space=vmem, size = 0x4000, scoped, tag = 'input window, operand 0']
    #allocation3 [shape = 's32[2]{0}', space=sflag, size = 0x8, scoped, tag = 'scoped memory for tpu_custom_call.1']
    #allocation4 [shape = 's32[2]{0}', space=sflag, size = 0x8, scoped, tag = 'scoped memory for tpu_custom_call.1']
    #allocation5 [shape = 'u8[4096]{0}', space=vmem, size = 0x1000, scoped, tag = 'input window, operand 1, single buffered']
    #allocation6 [shape = 's32[1]{0}', space=sflag, size = 0x4, scoped, tag = 'scoped memory for tpu_custom_call.1']
    #allocation7 [shape = 'u8[9216]{0}', space=vmem, size = 0x2400, scoped, tag = 'input window, operand 2, single buffered']
    #allocation8 [shape = 'u8[4096]{0}', space=vmem, size = 0x1000, scoped, tag = 'input window, operand 3, single buffered']
    #allocation9 [shape = 's32[1]{0}', space=sflag, size = 0x4, scoped, tag = 'scoped memory for tpu_custom_call.1']
    #allocation10 [shape = 'u8[9216]{0}', space=vmem, size = 0x2400, scoped, tag = 'input window, operand 4, single buffered']
    #allocation11 [shape = 'u8[16384]{0}', space=vmem, size = 0x4000, scoped, tag = 'output window, operand 0']
    %10 = vsyncpa [#allocation3], 0
    %s11 = scalar_lea.sflag [#allocation3], 1
    %12 = vsyncpa %s11, 0
    %13 = vsyncpa [#allocation6], 0
    %14 = vsyncpa [#allocation9], 0
    %15 = vsyncpa [#allocation4], 0
    %s16 = scalar_lea.sflag [#allocation4], 1
    %17 = vsyncpa %s16, 0
    loop: start=0, step=1, limit=4
    $region2: #{tpu_custom_call.1} parent=1 // loop_pre_header
      _
    $region3: #{tpu_custom_call.1} parent=1 // loop_header
      %s19 = sphi 0, %s23
      %p20 = scmp.ge.s32.totalorder %s19, 4
      %s29 = sphi 0, %s31
      %s32 = sphi 0, %s29
      %s33 = sphi 0, %s32
      %s49 = sphi 0, %s33
      %s53 = sphi 0, %s53
      %s55 = sphi 0, %s53
      %s56 = sphi 0, %s55
      %s70 = sphi 0, %s56
      %s74 = sphi 0, %s74
      %s76 = sphi 0, %s74
      %s77 = sphi 0, %s76
      %s91 = sphi 0, %s77
      %s95 = sphi 0, %s95
      %s97 = sphi 0, %s95
      %s98 = sphi 0, %s97
      %s112 = sphi 0, %s98
      %s116 = sphi 0, %s116
      %s118 = sphi 0, %s116
      %s119 = sphi 0, %s118
      %s133 = sphi 0, %s119
      %s139 = sphi 0, %s141
      %s142 = sphi 0, %s139
      %s143 = sphi 0, %s142
      %s159 = sphi 0, %s143
    $region4: #{tpu_custom_call.1} parent=1 // loop_header_branch
      %22 = sbr.rel (%p20) target = $region8
    $region5: #{tpu_custom_call.1} parent=1 // loop_body
      %s24 = ssub.s32 %s19, 1
      %s25 = ssub.s32 %s19, 2
      %s26 = sadd.s32 %s19, 1
      %s27 = ssub.s32 %s19, %s26
      %p28 = scmp.eq.s32.totalorder %s27, 0
      %s30 = sadd.s32 %s29, 1
      %s31 = scalar_select %p28, %s29, %s30
      %p34 = pneg %p28
      %p35 = scmp.eq.s32.totalorder %s19, 1
      %p36 = por %p34, %p35
      %p37 = scmp.ne.s32.totalorder %s29, %s32
      %p38 = scmp.eq.s32.totalorder %s19, 0
      %p39 = por %p37, %p38
      %p40 = scmp.ne.s32.totalorder %s29, %s32
      %p41 = scmp.eq.s32.totalorder %s24, 1
      %p42 = por %p40, %p41
      %p43 = scmp.ne.s32.totalorder %s32, %s33
      %p44 = scmp.eq.s32.totalorder %s24, 0
      %p45 = por %p43, %p44
      %p46 = scmp.ne.s32.totalorder %s32, %s33
      %p47 = scmp.eq.s32.totalorder %s25, 1
      %p48 = por %p46, %p47
      %p50 = scmp.ne.s32.totalorder %s33, %s49
      %p51 = scmp.eq.s32.totalorder %s25, 0
      %p52 = por %p50, %p51
      %s54 = sadd.s32 %s53, 1
      %p57 = scmp.eq.s32.totalorder %s19, 1
      %p58 = scmp.ne.s32.totalorder %s53, %s55
      %p59 = scmp.eq.s32.totalorder %s19, 0
      %p60 = por %p58, %p59
      %p61 = scmp.ne.s32.totalorder %s53, %s55
      %p62 = scmp.eq.s32.totalorder %s24, 1
      %p63 = por %p61, %p62
      %p64 = scmp.ne.s32.totalorder %s55, %s56
      %p65 = scmp.eq.s32.totalorder %s24, 0
      %p66 = por %p64, %p65
      %p67 = scmp.ne.s32.totalorder %s55, %s56
      %p68 = scmp.eq.s32.totalorder %s25, 1
      %p69 = por %p67, %p68
      %p71 = scmp.ne.s32.totalorder %s56, %s70
      %p72 = scmp.eq.s32.totalorder %s25, 0
      %p73 = por %p71, %p72
      %s75 = sadd.s32 %s74, 1
      %p78 = scmp.eq.s32.totalorder %s19, 1
      %p79 = scmp.ne.s32.totalorder %s74, %s76
      %p80 = scmp.eq.s32.totalorder %s19, 0
      %p81 = por %p79, %p80
      %p82 = scmp.ne.s32.totalorder %s74, %s76
      %p83 = scmp.eq.s32.totalorder %s24, 1
      %p84 = por %p82, %p83
      %p85 = scmp.ne.s32.totalorder %s76, %s77
      %p86 = scmp.eq.s32.totalorder %s24, 0
      %p87 = por %p85, %p86
      %p88 = scmp.ne.s32.totalorder %s76, %s77
      %p89 = scmp.eq.s32.totalorder %s25, 1
      %p90 = por %p88, %p89
      %p92 = scmp.ne.s32.totalorder %s77, %s91
      %p93 = scmp.eq.s32.totalorder %s25, 0
      %p94 = por %p92, %p93
      %s96 = sadd.s32 %s95, 1
      %p99 = scmp.eq.s32.totalorder %s19, 1
      %p100 = scmp.ne.s32.totalorder %s95, %s97
      %p101 = scmp.eq.s32.totalorder %s19, 0
      %p102 = por %p100, %p101
      %p103 = scmp.ne.s32.totalorder %s95, %s97
      %p104 = scmp.eq.s32.totalorder %s24, 1
      %p105 = por %p103, %p104
      %p106 = scmp.ne.s32.totalorder %s97, %s98
      %p107 = scmp.eq.s32.totalorder %s24, 0
      %p108 = por %p106, %p107
      %p109 = scmp.ne.s32.totalorder %s97, %s98
      %p110 = scmp.eq.s32.totalorder %s25, 1
      %p111 = por %p109, %p110
      %p113 = scmp.ne.s32.totalorder %s98, %s112
      %p114 = scmp.eq.s32.totalorder %s25, 0
      %p115 = por %p113, %p114
      %s117 = sadd.s32 %s116, 1
      %p120 = scmp.eq.s32.totalorder %s19, 1
      %p121 = scmp.ne.s32.totalorder %s116, %s118
      %p122 = scmp.eq.s32.totalorder %s19, 0
      %p123 = por %p121, %p122
      %p124 = scmp.ne.s32.totalorder %s116, %s118
      %p125 = scmp.eq.s32.totalorder %s24, 1
      %p126 = por %p124, %p125
      %p127 = scmp.ne.s32.totalorder %s118, %s119
      %p128 = scmp.eq.s32.totalorder %s24, 0
      %p129 = por %p127, %p128
      %p130 = scmp.ne.s32.totalorder %s118, %s119
      %p131 = scmp.eq.s32.totalorder %s25, 1
      %p132 = por %p130, %p131
      %p134 = scmp.ne.s32.totalorder %s119, %s133
      %p135 = scmp.eq.s32.totalorder %s25, 0
      %p136 = por %p134, %p135
      %s137 = ssub.s32 %s19, %s26
      %p138 = scmp.eq.s32.totalorder %s137, 0
      %s140 = sadd.s32 %s139, 1
      %s141 = scalar_select %p138, %s139, %s140
      %p144 = pneg %p138
      %p145 = scmp.eq.s32.totalorder %s19, 1
      %p146 = por %p144, %p145
      %p147 = scmp.ne.s32.totalorder %s139, %s142
      %p148 = scmp.eq.s32.totalorder %s19, 0
      %p149 = por %p147, %p148
      %p150 = scmp.ne.s32.totalorder %s139, %s142
      %p151 = scmp.eq.s32.totalorder %s24, 1
      %p152 = por %p150, %p151
      %p153 = scmp.ne.s32.totalorder %s142, %s143
      %p154 = scmp.eq.s32.totalorder %s24, 0
      %p155 = por %p153, %p154
      %p156 = scmp.ne.s32.totalorder %s142, %s143
      %p157 = scmp.eq.s32.totalorder %s25, 1
      %p158 = por %p156, %p157
      %p160 = scmp.ne.s32.totalorder %s143, %s159
      %p161 = scmp.eq.s32.totalorder %s25, 0
      %p162 = por %p160, %p161
      %p163 = scmp.le.s32.totalorder 1, %s19
      %p164 = scmp.lt.s32.totalorder %s19, 3
      %p165 = pnand %p163, %p164
      %p166 = pneg %p165
      // Predicated region
      $region9: #{tpu_custom_call.1} parent=5 // pred_check
        _
      $region10: #{tpu_custom_call.1} parent=5 // pred_check_branch
        %168 = sbr.rel (%p165) target = $region12
      $region11: #{tpu_custom_call.1} parent=5 // pred_region
        %s169 = ssub.s32 %s19, 1
        // Predicated region
        $region13: #{tpu_custom_call.1} parent=11 // pred_check
          %p170 = pneg %p66
        $region14: #{tpu_custom_call.1} parent=11 // pred_check_branch
          %172 = sbr.rel (%p170) target = $region16
        $region15: #{tpu_custom_call.1} parent=11 // pred_region
          %174 = vsyncadd [#allocation6], 0
          %s176 = sshll.u32 %s1, 4
          %s177 = int_to_ptr.hbm [resolvable:$true] %s176
          %s178 = sshll.u32 [#allocation5], 4
          %s179 = int_to_ptr.vmem [resolvable:$true] %s178
          %181 = dma.hbm_to_vmem [thread:$0]  %s177, 128, %s179, [#allocation6]
        $region16: #{tpu_custom_call.1} parent=11 // pred_fallthru
          _
        // Predicated region
        $region17: #{tpu_custom_call.1} parent=11 // pred_check
          %p182 = pneg %p87
        $region18: #{tpu_custom_call.1} parent=11 // pred_check_branch
          %184 = sbr.rel (%p182) target = $region20
        $region19: #{tpu_custom_call.1} parent=11 // pred_region
          %186 = vsyncadd [#allocation6], 0
          %s187 = sshll.u32 %s2, 4
          %s188 = int_to_ptr.hbm [resolvable:$true] %s187
          %s189 = sshll.u32 [#allocation7], 4
          %s190 = int_to_ptr.vmem [resolvable:$true] %s189
          %195 = dma.hbm_to_vmem [thread:$0]  %s188, 288, %s190, [#allocation6], 32, 32, 2
        $region20: #{tpu_custom_call.1} parent=11 // pred_fallthru
          _
        // Predicated region
        $region21: #{tpu_custom_call.1} parent=11 // pred_check
          %p196 = pneg %p108
        $region22: #{tpu_custom_call.1} parent=11 // pred_check_branch
          %198 = sbr.rel (%p196) target = $region24
        $region23: #{tpu_custom_call.1} parent=11 // pred_region
          %200 = vsyncadd [#allocation9], 0
          %s202 = sshll.u32 %s3, 4
          %s203 = int_to_ptr.hbm [resolvable:$true] %s202
          %s204 = sshll.u32 [#allocation8], 4
          %s205 = int_to_ptr.vmem [resolvable:$true] %s204
          %207 = dma.hbm_to_vmem [thread:$0]  %s203, 128, %s205, [#allocation9]
        $region24: #{tpu_custom_call.1} parent=11 // pred_fallthru
          _
        // Predicated region
        $region25: #{tpu_custom_call.1} parent=11 // pred_check
          %p208 = pneg %p129
        $region26: #{tpu_custom_call.1} parent=11 // pred_check_branch
          %210 = sbr.rel (%p208) target = $region28
        $region27: #{tpu_custom_call.1} parent=11 // pred_region
          %212 = vsyncadd [#allocation9], 0
          %s213 = sshll.u32 %s4, 4
          %s214 = int_to_ptr.hbm [resolvable:$true] %s213
          %s215 = sshll.u32 [#allocation10], 4
          %s216 = int_to_ptr.vmem [resolvable:$true] %s215
          %221 = dma.hbm_to_vmem [thread:$0]  %s214, 288, %s216, [#allocation9], 32, 32, 2
        $region28: #{tpu_custom_call.1} parent=11 // pred_fallthru
          _
      $region12: #{tpu_custom_call.1} parent=5 // pred_fallthru
        _
      %p222 = scmp.lt.s32.totalorder %s19, 2
      // Predicated region
      $region29: #{tpu_custom_call.1} parent=5 // pred_check
        %p223 = pneg %p222
      $region30: #{tpu_custom_call.1} parent=5 // pred_check_branch
        %225 = sbr.rel (%p223) target = $region32
      $region31: #{tpu_custom_call.1} parent=5 // pred_region
        // Predicated region
        $region33: #{tpu_custom_call.1} parent=31 // pred_check
          %p226 = pneg %p39
        $region34: #{tpu_custom_call.1} parent=31 // pred_check_branch
          %228 = sbr.rel (%p226) target = $region36
        $region35: #{tpu_custom_call.1} parent=31 // pred_region
          %s229 = sand.u32 %s29, 1
          %s230 = scalar_lea.sflag [#allocation3], %s229
          %s231 = sand.u32 %s29, 1
          %s232 = smul.addr %s231, 16
          %s233 = scalar_lea.vmem [#allocation2], %s232
          %235 = vsyncadd %s230, 0
          %s236 = smul.addr %s19, 2
          %s237 = smul.addr %s236, 8
          %s238 = scalar_lea.hbm %s0, %s237
          %s240 = sshll.u32 %s238, 4
          %s241 = int_to_ptr.hbm [resolvable:$true] %s240
          %s242 = sshll.u32 %s233, 4
          %s243 = int_to_ptr.vmem [resolvable:$true] %s242
          %245 = dma.hbm_to_vmem [thread:$0]  %s241, 256, %s243, %s230
        $region36: #{tpu_custom_call.1} parent=31 // pred_fallthru
          _
      $region32: #{tpu_custom_call.1} parent=5 // pred_fallthru
        _
      %p246 = scmp.le.s32.totalorder 1, %s19
      %p247 = scmp.lt.s32.totalorder %s19, 3
      %p248 = pnand %p246, %p247
      %p249 = pneg %p248
      // Predicated region
      $region37: #{tpu_custom_call.1} parent=5 // pred_check
        _
      $region38: #{tpu_custom_call.1} parent=5 // pred_check_branch
        %251 = sbr.rel (%p248) target = $region40
      $region39: #{tpu_custom_call.1} parent=5 // pred_region
        %s252 = ssub.s32 %s19, 1
        %s253 = sand.u32 %s32, 1
        %s254 = scalar_lea.sflag [#allocation3], %s253
        %s255 = sand.u32 %s32, 1
        %s256 = smul.addr %s255, 16
        %s257 = scalar_lea.vmem [#allocation2], %s256
        // Predicated region
        $region41: #{tpu_custom_call.1} parent=39 // pred_check
          %p258 = pneg %p45
        $region42: #{tpu_custom_call.1} parent=39 // pred_check_branch
          %260 = sbr.rel (%p258) target = $region44
        $region43: #{tpu_custom_call.1} parent=39 // pred_region
          %262 = dma.done %s254, 256
        $region44: #{tpu_custom_call.1} parent=39 // pred_fallthru
          _
        // Predicated region
        $region45: #{tpu_custom_call.1} parent=39 // pred_check
          %p263 = pneg %p66
        $region46: #{tpu_custom_call.1} parent=39 // pred_check_branch
          %265 = sbr.rel (%p263) target = $region48
        $region47: #{tpu_custom_call.1} parent=39 // pred_region
          %267 = dma.done [#allocation6], 128
        $region48: #{tpu_custom_call.1} parent=39 // pred_fallthru
          _
        // Predicated region
        $region49: #{tpu_custom_call.1} parent=39 // pred_check
          %p268 = pneg %p87
        $region50: #{tpu_custom_call.1} parent=39 // pred_check_branch
          %270 = sbr.rel (%p268) target = $region52
        $region51: #{tpu_custom_call.1} parent=39 // pred_region
          %272 = dma.done [#allocation6], 288
        $region52: #{tpu_custom_call.1} parent=39 // pred_fallthru
          _
        // Predicated region
        $region53: #{tpu_custom_call.1} parent=39 // pred_check
          %p273 = pneg %p108
        $region54: #{tpu_custom_call.1} parent=39 // pred_check_branch
          %275 = sbr.rel (%p273) target = $region56
        $region55: #{tpu_custom_call.1} parent=39 // pred_region
          %277 = dma.done [#allocation9], 128
        $region56: #{tpu_custom_call.1} parent=39 // pred_fallthru
          _
        // Predicated region
        $region57: #{tpu_custom_call.1} parent=39 // pred_check
          %p278 = pneg %p129
        $region58: #{tpu_custom_call.1} parent=39 // pred_check_branch
          %280 = sbr.rel (%p278) target = $region60
        $region59: #{tpu_custom_call.1} parent=39 // pred_region
          %282 = dma.done [#allocation9], 288
        $region60: #{tpu_custom_call.1} parent=39 // pred_fallthru
          _
        %s283 = sand.u32 %s32, 1
        %s284 = scalar_lea.sflag [#allocation3], %s283
        %s285 = sand.u32 %s32, 1
        %s286 = smul.addr %s285, 16
        %s287 = scalar_lea.vmem [#allocation2], %s286
        %p288 = pneg %p45
        %p289 = pneg %p42
        %p290 = pneg %p66
        %p291 = pneg %p63
        %p292 = pneg %p87
        %p293 = pneg %p84
        %p294 = pneg %p108
        %p295 = pneg %p105
        %p296 = pneg %p129
        %p297 = pneg %p126
        %p298 = pneg %p155
        %p299 = pneg %p152
        %s300 = sand.u32 %s142, 1
        %s301 = scalar_lea.sflag [#allocation4], %s300
        %s302 = sand.u32 %s142, 1
        %s303 = smul.addr %s302, 16
        %s304 = scalar_lea.vmem [#allocation11], %s303
        %v305 = vlaneseq
        %v306 = vshrl.u32 %v305, 7
        %vm307 = vcmp.eq.s32.totalorder %v306, 0
        %v308 = vsel %vm307, 1, 0
        %v309 = vcvt.s32.f32 %v308
        %v310 = vld [vmem:[%s257] sm:$0xff]
        %v311 = vld [vmem:[%s257 + $0x8] sm:$0xff]
        %v312 = vld [vmem:[#allocation5] sm:$0xff]
        %313 = vrot.lane.b32.xlu0 %v310, 17
        %v314 = vpop.permute.xlu0 %313
        %315 = vrot.lane.b32.xlu0 %v311, 17
        %v316 = vpop.permute.xlu0 %315
        %v317 = vlaneseq
        %v318 = vand.u32 %v317, 127
        %vm319 = vcmp.lt.s32.totalorder %v318, 17
        %v320 = vsel %vm319, %v314, %v316
        %v321 = vsel %vm319, %v316, %v314
        %v322 = vld [vmem:[#allocation7] sm:$0x3]
        %v324 = vperm.slane %v322, 0
        %v325 = vperm.slane %v322, 1
        %v328 = vmul.f32 %v321, %v324
        %v329 = vmul.f32 %v320, %v325
        %330 = vrot.lane.b32.xlu0 %v310, 16
        %v331 = vpop.permute.xlu0 %330
        %332 = vrot.lane.b32.xlu0 %v311, 16
        %v333 = vpop.permute.xlu0 %332
        %vm334 = vcmp.lt.s32.totalorder %v318, 16
        %v335 = vsel %vm334, %v331, %v333
        %v336 = vsel %vm334, %v333, %v331
        %s337 = scalar_lea.vmem [#allocation7], 2
        %v338 = vld [vmem:[%s337] sm:$0x3]
        %v340 = vperm.slane %v338, 0
        %v341 = vperm.slane %v338, 1
        %v344 = vmul.f32 %v336, %v340
        %v345 = vmul.f32 %v335, %v341
        %346 = vrot.lane.b32.xlu0 %v310, 15
        %v347 = vpop.permute.xlu0 %346
        %348 = vrot.lane.b32.xlu0 %v311, 15
        %v349 = vpop.permute.xlu0 %348
        %vm350 = vcmp.lt.s32.totalorder %v318, 15
        %v351 = vsel %vm350, %v347, %v349
        %v352 = vsel %vm350, %v349, %v347
        %s353 = scalar_lea.vmem [#allocation7], 4
        %v354 = vld [vmem:[%s353] sm:$0x3]
        %v356 = vperm.slane %v354, 0
        %v357 = vperm.slane %v354, 1
        %v360 = vmul.f32 %v352, %v356
        %v361 = vmul.f32 %v351, %v357
        %362 = vrot.lane.b32.xlu0 %v310, 1
        %v363 = vpop.permute.xlu0 %362
        %364 = vrot.lane.b32.xlu0 %v311, 1
        %v365 = vpop.permute.xlu0 %364
        %vm366 = vcmp.lt.s32.totalorder %v318, 1
        %v367 = vsel %vm366, %v363, %v365
        %v368 = vsel %vm366, %v365, %v363
        %s369 = scalar_lea.vmem [#allocation7], 6
        %v370 = vld [vmem:[%s369] sm:$0x3]
        %v372 = vperm.slane %v370, 0
        %v373 = vperm.slane %v370, 1
        %v376 = vmul.f32 %v368, %v372
        %v377 = vmul.f32 %v367, %v373
        %378 = vrot.lane.b32.xlu0 %v310, 127
        %v379 = vpop.permute.xlu0 %378
        %380 = vrot.lane.b32.xlu0 %v311, 127
        %v381 = vpop.permute.xlu0 %380
        %vm382 = vcmp.lt.s32.totalorder %v318, 127
        %v383 = vsel %vm382, %v379, %v381
        %v384 = vsel %vm382, %v381, %v379
        %s385 = scalar_lea.vmem [#allocation7], 10
        %v386 = vld [vmem:[%s385] sm:$0x3]
        %v388 = vperm.slane %v386, 0
        %v389 = vperm.slane %v386, 1
        %v392 = vmul.f32 %v383, %v388
        %v393 = vmul.f32 %v384, %v389
        %394 = vrot.lane.b32.xlu0 %v310, 113
        %v395 = vpop.permute.xlu0 %394
        %396 = vrot.lane.b32.xlu0 %v311, 113
        %v397 = vpop.permute.xlu0 %396
        %vm398 = vcmp.lt.s32.totalorder %v318, 113
        %v399 = vsel %vm398, %v395, %v397
        %v400 = vsel %vm398, %v397, %v395
        %s401 = scalar_lea.vmem [#allocation7], 12
        %v402 = vld [vmem:[%s401] sm:$0x3]
        %v404 = vperm.slane %v402, 0
        %v405 = vperm.slane %v402, 1
        %v408 = vmul.f32 %v399, %v404
        %v409 = vmul.f32 %v400, %v405
        %410 = vrot.lane.b32.xlu0 %v310, 112
        %v411 = vpop.permute.xlu0 %410
        %412 = vrot.lane.b32.xlu0 %v311, 112
        %v413 = vpop.permute.xlu0 %412
        %vm414 = vcmp.lt.s32.totalorder %v318, 112
        %v415 = vsel %vm414, %v411, %v413
        %v416 = vsel %vm414, %v413, %v411
        %s417 = scalar_lea.vmem [#allocation7], 14
        %v418 = vld [vmem:[%s417] sm:$0x3]
        %v420 = vperm.slane %v418, 0
        %v421 = vperm.slane %v418, 1
        %v424 = vmul.f32 %v415, %v420
        %v425 = vmul.f32 %v416, %v421
        %426 = vrot.lane.b32.xlu0 %v310, 111
        %v427 = vpop.permute.xlu0 %426
        %428 = vrot.lane.b32.xlu0 %v311, 111
        %v429 = vpop.permute.xlu0 %428
        %vm430 = vcmp.lt.s32.totalorder %v318, 111
        %v431 = vsel %vm430, %v427, %v429
        %v432 = vsel %vm430, %v429, %v427
        %s433 = scalar_lea.vmem [#allocation7], 16
        %v434 = vld [vmem:[%s433] sm:$0x3]
        %v436 = vperm.slane %v434, 0
        %v437 = vperm.slane %v434, 1
        %v440 = vmul.f32 %v431, %v436
        %v441 = vmul.f32 %v432, %v437
        %vm442 = vcmask 654336
        %v444 = vsel %vm442, %v312, 0
        %446 = vmatpush.msra.mxu0 0.0
        %447 = vmatpush.msra.mxu0 0.0
        %448 = vmatpush.msra.mxu0 0.0
        %449 = vmatpush.msra.mxu0 0.0
        %450 = vmatpush.msra.mxu0 0.0
        %451 = vmatpush.msra.mxu0 0.0
        %452 = vmatpush.msra.mxu0 %v309
        %453 = vmatpush.msra.mxu0 %v440
        %454 = vmatpush.msra.mxu0 %v424
        %455 = vmatpush.msra.mxu0 %v408
        %456 = vmatpush.msra.mxu0 %v392
        %457 = vmatpush.msra.mxu0 %v310
        %458 = vmatpush.msra.mxu0 %v376
        %459 = vmatpush.msra.mxu0 %v360
        %460 = vmatpush.msra.mxu0 %v344
        %461 = vmatpush.msra.mxu0 %v328
        %462 = vmatmul.f32.gmra.mxu0 %v444
        %v463 = vpop.f32.mrf.mxu0
        %v464 = vadd.f32 0.0, %v463
        %465 = vdwg.mxu0
        %466 = vmatpush.msra.mxu0 0.0
        %467 = vmatpush.msra.mxu0 0.0
        %468 = vmatpush.msra.mxu0 0.0
        %469 = vmatpush.msra.mxu0 0.0
        %470 = vmatpush.msra.mxu0 0.0
        %471 = vmatpush.msra.mxu0 0.0
        %472 = vmatpush.msra.mxu0 %v309
        %473 = vmatpush.msra.mxu0 %v441
        %474 = vmatpush.msra.mxu0 %v425
        %475 = vmatpush.msra.mxu0 %v409
        %476 = vmatpush.msra.mxu0 %v393
        %477 = vmatpush.msra.mxu0 %v311
        %478 = vmatpush.msra.mxu0 %v377
        %479 = vmatpush.msra.mxu0 %v361
        %480 = vmatpush.msra.mxu0 %v345
        %481 = vmatpush.msra.mxu0 %v329
        %482 = vmatmul.f32.gmra.mxu0 %v444
        %v483 = vpop.f32.mrf.mxu0
        %v484 = vadd.f32 0.0, %v483
        %485 = vdwg.mxu0
        %v486 = vld [vmem:[#allocation8] sm:$0xff]
        %487 = vrot.lane.b32.xlu0 %v464, 51
        %v488 = vpop.permute.xlu0 %487
        %489 = vrot.lane.b32.xlu0 %v484, 51
        %v490 = vpop.permute.xlu0 %489
        %vm491 = vcmp.lt.s32.totalorder %v318, 51
        %v492 = vsel %vm491, %v488, %v490
        %v493 = vsel %vm491, %v490, %v488
        %v494 = vld [vmem:[#allocation10] sm:$0x3]
        %v496 = vperm.slane %v494, 0
        %v497 = vperm.slane %v494, 1
        %v500 = vmul.f32 %v493, %v496
        %v501 = vmul.f32 %v492, %v497
        %502 = vrot.lane.b32.xlu0 %v464, 48
        %v503 = vpop.permute.xlu0 %502
        %504 = vrot.lane.b32.xlu0 %v484, 48
        %v505 = vpop.permute.xlu0 %504
        %vm506 = vcmp.lt.s32.totalorder %v318, 48
        %v507 = vsel %vm506, %v503, %v505
        %v508 = vsel %vm506, %v505, %v503
        %s509 = scalar_lea.vmem [#allocation10], 2
        %v510 = vld [vmem:[%s509] sm:$0x3]
        %v512 = vperm.slane %v510, 0
        %v513 = vperm.slane %v510, 1
        %v516 = vmul.f32 %v508, %v512
        %v517 = vmul.f32 %v507, %v513
        %518 = vrot.lane.b32.xlu0 %v464, 45
        %v519 = vpop.permute.xlu0 %518
        %520 = vrot.lane.b32.xlu0 %v484, 45
        %v521 = vpop.permute.xlu0 %520
        %vm522 = vcmp.lt.s32.totalorder %v318, 45
        %v523 = vsel %vm522, %v519, %v521
        %v524 = vsel %vm522, %v521, %v519
        %s525 = scalar_lea.vmem [#allocation10], 4
        %v526 = vld [vmem:[%s525] sm:$0x3]
        %v528 = vperm.slane %v526, 0
        %v529 = vperm.slane %v526, 1
        %v532 = vmul.f32 %v524, %v528
        %v533 = vmul.f32 %v523, %v529
        %534 = vrot.lane.b32.xlu0 %v464, 3
        %v535 = vpop.permute.xlu0 %534
        %536 = vrot.lane.b32.xlu0 %v484, 3
        %v537 = vpop.permute.xlu0 %536
        %vm538 = vcmp.lt.s32.totalorder %v318, 3
        %v539 = vsel %vm538, %v535, %v537
        %v540 = vsel %vm538, %v537, %v535
        %s541 = scalar_lea.vmem [#allocation10], 6
        %v542 = vld [vmem:[%s541] sm:$0x3]
        %v544 = vperm.slane %v542, 0
        %v545 = vperm.slane %v542, 1
        %v548 = vmul.f32 %v540, %v544
        %v549 = vmul.f32 %v539, %v545
        %550 = vrot.lane.b32.xlu0 %v464, 125
        %v551 = vpop.permute.xlu0 %550
        %552 = vrot.lane.b32.xlu0 %v484, 125
        %v553 = vpop.permute.xlu0 %552
        %vm554 = vcmp.lt.s32.totalorder %v318, 125
        %v555 = vsel %vm554, %v551, %v553
        %v556 = vsel %vm554, %v553, %v551
        %s557 = scalar_lea.vmem [#allocation10], 10
        %v558 = vld [vmem:[%s557] sm:$0x3]
        %v560 = vperm.slane %v558, 0
        %v561 = vperm.slane %v558, 1
        %v564 = vmul.f32 %v555, %v560
        %v565 = vmul.f32 %v556, %v561
        %566 = vrot.lane.b32.xlu0 %v464, 83
        %v567 = vpop.permute.xlu0 %566
        %568 = vrot.lane.b32.xlu0 %v484, 83
        %v569 = vpop.permute.xlu0 %568
        %vm570 = vcmp.lt.s32.totalorder %v318, 83
        %v571 = vsel %vm570, %v567, %v569
        %v572 = vsel %vm570, %v569, %v567
        %s573 = scalar_lea.vmem [#allocation10], 12
        %v574 = vld [vmem:[%s573] sm:$0x3]
        %v576 = vperm.slane %v574, 0
        %v577 = vperm.slane %v574, 1
        %v580 = vmul.f32 %v571, %v576
        %v581 = vmul.f32 %v572, %v577
        %582 = vrot.lane.b32.xlu0 %v464, 80
        %v583 = vpop.permute.xlu0 %582
        %584 = vrot.lane.b32.xlu0 %v484, 80
        %v585 = vpop.permute.xlu0 %584
        %vm586 = vcmp.lt.s32.totalorder %v318, 80
        %v587 = vsel %vm586, %v583, %v585
        %v588 = vsel %vm586, %v585, %v583
        %s589 = scalar_lea.vmem [#allocation10], 14
        %v590 = vld [vmem:[%s589] sm:$0x3]
        %v592 = vperm.slane %v590, 0
        %v593 = vperm.slane %v590, 1
        %v596 = vmul.f32 %v587, %v592
        %v597 = vmul.f32 %v588, %v593
        %598 = vrot.lane.b32.xlu0 %v464, 77
        %v599 = vpop.permute.xlu0 %598
        %600 = vrot.lane.b32.xlu0 %v484, 77
        %v601 = vpop.permute.xlu0 %600
        %vm602 = vcmp.lt.s32.totalorder %v318, 77
        %v603 = vsel %vm602, %v599, %v601
        %v604 = vsel %vm602, %v601, %v599
        %s605 = scalar_lea.vmem [#allocation10], 16
        %v606 = vld [vmem:[%s605] sm:$0x3]
        %v608 = vperm.slane %v606, 0
        %v609 = vperm.slane %v606, 1
        %v612 = vmul.f32 %v603, %v608
        %v613 = vmul.f32 %v604, %v609
        %v615 = vsel %vm442, %v486, 0
        %617 = vmatpush.msra.mxu0 0.0
        %618 = vmatpush.msra.mxu0 0.0
        %619 = vmatpush.msra.mxu0 0.0
        %620 = vmatpush.msra.mxu0 0.0
        %621 = vmatpush.msra.mxu0 0.0
        %622 = vmatpush.msra.mxu0 0.0
        %623 = vmatpush.msra.mxu0 %v309
        %624 = vmatpush.msra.mxu0 %v612
        %625 = vmatpush.msra.mxu0 %v596
        %626 = vmatpush.msra.mxu0 %v580
        %627 = vmatpush.msra.mxu0 %v564
        %628 = vmatpush.msra.mxu0 %v464
        %629 = vmatpush.msra.mxu0 %v548
        %630 = vmatpush.msra.mxu0 %v532
        %631 = vmatpush.msra.mxu0 %v516
        %632 = vmatpush.msra.mxu0 %v500
        %633 = vmatmul.f32.gmra.mxu0 %v615
        %v634 = vpop.f32.mrf.mxu0
        %v635 = vadd.f32 0.0, %v634
        %636 = vdwg.mxu0
        %637 = vmatpush.msra.mxu0 0.0
        %638 = vmatpush.msra.mxu0 0.0
        %639 = vmatpush.msra.mxu0 0.0
        %640 = vmatpush.msra.mxu0 0.0
        %641 = vmatpush.msra.mxu0 0.0
        %642 = vmatpush.msra.mxu0 0.0
        %643 = vmatpush.msra.mxu0 %v309
        %644 = vmatpush.msra.mxu0 %v613
        %645 = vmatpush.msra.mxu0 %v597
        %646 = vmatpush.msra.mxu0 %v581
        %647 = vmatpush.msra.mxu0 %v565
        %648 = vmatpush.msra.mxu0 %v484
        %649 = vmatpush.msra.mxu0 %v549
        %650 = vmatpush.msra.mxu0 %v533
        %651 = vmatpush.msra.mxu0 %v517
        %652 = vmatpush.msra.mxu0 %v501
        %653 = vmatmul.f32.gmra.mxu0 %v615
        %v654 = vpop.f32.mrf.mxu0
        %v655 = vadd.f32 0.0, %v654
        %656 = vdwg.mxu0
        %657 = vst [vmem:[%s304] sm:$0xff] %v635
        %658 = vst [vmem:[%s304 + $0x8] sm:$0xff] %v655
        %s659 = sand.u32 %s142, 1
        %s660 = scalar_lea.sflag [#allocation4], %s659
        %s661 = sand.u32 %s142, 1
        %s662 = smul.addr %s661, 16
        %s663 = scalar_lea.vmem [#allocation11], %s662
        // Predicated region
        $region61: #{tpu_custom_call.1} parent=39 // pred_check
          %p664 = pneg %p152
        $region62: #{tpu_custom_call.1} parent=39 // pred_check_branch
          %666 = sbr.rel (%p664) target = $region64
        $region63: #{tpu_custom_call.1} parent=39 // pred_region
          %668 = vsyncadd %s660, 0
          %s669 = smul.addr %s24, 2
          %s670 = smul.addr %s669, 8
          %s671 = scalar_lea.hbm %s5, %s670
          %s673 = sshll.u32 %s663, 4
          %s674 = int_to_ptr.vmem [resolvable:$true] %s673
          %s675 = sshll.u32 %s671, 4
          %s676 = int_to_ptr.hbm [resolvable:$true] %s675
          %678 = dma.vmem_to_hbm [thread:$0]  %s674, 256, %s676, %s660
        $region64: #{tpu_custom_call.1} parent=39 // pred_fallthru
          _
      $region40: #{tpu_custom_call.1} parent=5 // pred_fallthru
        _
      %p679 = scmp.le.s32.totalorder 2, %s19
      // Predicated region
      $region65: #{tpu_custom_call.1} parent=5 // pred_check
        %p680 = pneg %p679
      $region66: #{tpu_custom_call.1} parent=5 // pred_check_branch
        %682 = sbr.rel (%p680) target = $region68
      $region67: #{tpu_custom_call.1} parent=5 // pred_region
        %s683 = ssub.s32 %s19, 2
        // Predicated region
        $region69: #{tpu_custom_call.1} parent=67 // pred_check
          %p684 = pneg %p158
        $region70: #{tpu_custom_call.1} parent=67 // pred_check_branch
          %686 = sbr.rel (%p684) target = $region72
        $region71: #{tpu_custom_call.1} parent=67 // pred_region
          %s687 = sand.u32 %s143, 1
          %s688 = scalar_lea.sflag [#allocation4], %s687
          %s689 = sand.u32 %s143, 1
          %s690 = smul.addr %s689, 16
          %s691 = scalar_lea.vmem [#allocation11], %s690
          %693 = dma.done %s688, 256
        $region72: #{tpu_custom_call.1} parent=67 // pred_fallthru
          _
      $region68: #{tpu_custom_call.1} parent=5 // pred_fallthru
        _
    $region6: #{tpu_custom_call.1} parent=1 // loop_footer
      %s23 = sadd.s32 1, %s19
    $region7: #{tpu_custom_call.1} parent=1 // loop_footer_branch
      %18 = sbr.rel target = $region3
    $region8: #{tpu_custom_call.1} parent=1 // loop_exit
      _
    %694 = vsyncpa [#allocation3], 1
    %s695 = scalar_lea.sflag [#allocation3], 1
    %696 = vsyncpa %s695, 1
    %697 = vsyncpa [#allocation6], 1
    %698 = vsyncpa [#allocation9], 1
    %699 = vsyncpa [#allocation4], 1
    %s700 = scalar_lea.sflag [#allocation4], 1
    %701 = vsyncpa %s700, 1

</llo_original>
